<compile_context>
chip_gen: v6e
topology: v6e:2x2x1
jax: 0.10.0
libtpu: 0.0.40
codegen_flags: <defaults>
</compile_context>

<pallas_src>
import math

import jax
import jax.numpy as jnp
from jax.experimental import pallas as pl
from jax.experimental.pallas import tpu as pltpu


def _fused_conv_unshuffle_kernel(x_top_ref, x_mid_ref, x_bot_ref, w_ref,
                                 o_ref, xpad_ref):
    # x_top_ref: (1,   2, Wo, 2*C)  row-pair just above the tile (valid when t > 0)
    # x_mid_ref: (tHo, 2, Wo, 2*C)  the tile's own row pairs
    # x_bot_ref: (1,   2, Wo, 2*C)  row-pair just below the tile (valid when t < nT-1)
    # w_ref:     (16*C, 4*Cout)     expanded stride-2 4x4 conv weight
    # o_ref:     (tHo, Wo, 4*Cout)  final (already pixel-unshuffled) output tile
    # xpad_ref:  (tHo+2, 2, Wo+2, 2*C) zero-padded working tile (VMEM scratch)
    tHo, Wo, C4 = o_ref.shape
    C2 = x_mid_ref.shape[-1]
    C = C2 // 2

    t = pl.program_id(1)
    nT = pl.num_programs(1)

    # ---- build the zero-padded tile (SAME padding done in VMEM, not in HBM) ----
    xpad_ref[...] = jnp.zeros_like(xpad_ref)
    xpad_ref[1:tHo + 1, :, 1:Wo + 1, :] = x_mid_ref[...]

    @pl.when(t > 0)
    def _():
        # top halo: input row (2*t*tHo - 1) == row-pair (t*tHo - 1), parity 1
        xpad_ref[0, 1, 1:Wo + 1, :] = x_top_ref[0, 1, :, :]

    @pl.when(t < nT - 1)
    def _():
        # bottom halo: input row (2*(t+1)*tHo) == row-pair ((t+1)*tHo), parity 0
        xpad_ref[tHo + 1, 0, 1:Wo + 1, :] = x_bot_ref[0, 0, :, :]

    # ---- im2col for the fused stride-2 4x4 conv (= conv3x3 + PixelUnshuffle(2)) ----
    # tap offset d in {0,1,2,3} along an axis reads padded pair index (local + (d+1)//2)
    # at parity (d+1) % 2; along W the parity lives in the lane dim (slice of width C).
    taps = []
    for u in range(4):
        pu, ru = (u + 1) // 2, (u + 1) % 2
        for v in range(4):
            qv, sv = (v + 1) // 2, (v + 1) % 2
            taps.append(
                xpad_ref[pu:pu + tHo, ru, qv:qv + Wo, sv * C:(sv + 1) * C])
    patches = jnp.concatenate(taps, axis=-1)          # (tHo, Wo, 16*C)
    patches = patches.reshape(tHo * Wo, 16 * C)

    acc = jnp.dot(patches, w_ref[...], preferred_element_type=jnp.float32)
    o_ref[...] = acc.reshape(tHo, Wo, C4).astype(o_ref.dtype)


def _build_expanded_weight(w_oihw, dtype):
    """PyTorch (Cout, Cin, 3, 3) conv weight -> (16*Cin, 4*Cout) fused weight.

    Fused op: out[h', w', c*4 + 2i + j] = sum_{u,v,cin} x_pad[2h'+u, 2w'+v, cin] *
              W16[(u*4+v)*Cin + cin, c*4 + 2i + j],  with
              W16[...] = w[c, cin, u-i, v-j] when 0 <= u-i < 3 and 0 <= v-j < 3, else 0.
    """
    Cout, Cin, _, _ = w_oihw.shape
    w_hwio = jnp.transpose(w_oihw, (2, 3, 1, 0))            # (3, 3, Cin, Cout)
    w16 = jnp.zeros((4, 4, Cin, Cout, 2, 2), dtype=w_hwio.dtype)
    for i in range(2):
        for j in range(2):
            w16 = w16.at[i:i + 3, j:j + 3, :, :, i, j].set(w_hwio)
    return w16.reshape(16 * Cin, 4 * Cout).astype(dtype)


def _pick_tile_rows(Ho, Wo, C, itemsize, budget_bytes=4 << 20):
    """Largest divisor of Ho whose rough per-step VMEM footprint fits the budget."""
    C2 = 2 * C
    C4 = 2 * C  # 4 * (C // 2)
    best = 1
    for cand in range(1, Ho + 1):
        if Ho % cand:
            continue
        mid_in = cand * 2 * Wo * C2 * itemsize           # input block
        scratch = (cand + 2) * 2 * (Wo + 2) * C2 * itemsize
        patches = cand * Wo * 16 * C * itemsize
        acc = cand * Wo * C4 * 4                          # f32 matmul result
        out_blk = cand * Wo * C4 * itemsize
        total = 2 * mid_in + scratch + patches + acc + 2 * out_blk
        if total <= budget_bytes:
            best = cand
    return best


def downsample_shuffle(x_blc, w_oihw, *, tile_out_rows=None):
    """Equivalent of Downsample_shuffle.forward.

    x_blc:  (B, L, C) with L = H*W (square, H and W even)
    w_oihw: (C//2, C, 3, 3) PyTorch Conv2d weight (no bias)
    returns (B, L//4, 2*C)
    """
    B, L, C = x_blc.shape
    H = int(math.isqrt(L))
    W = H
    assert H * W == L, "sequence length must be a perfect square"
    assert H % 2 == 0 and W % 2 == 0, "spatial dims must be even for PixelUnshuffle(2)"
    Cout = w_oihw.shape[0]
    Ho, Wo = H // 2, W // 2
    C2 = 2 * C
    C4 = 4 * Cout

    # (B, L, C) -> (B, Ho, 2, Wo, 2*C): contiguous regrouping, no HBM pass.
    # x6[b, P, r, Q, s*C + c] == x[b, 2P + r, 2Q + s, c]
    x6 = x_blc.reshape(B, Ho, 2, Wo, C2)
    w16 = _build_expanded_weight(w_oihw, x_blc.dtype)

    if tile_out_rows is None:
        tile_out_rows = _pick_tile_rows(Ho, Wo, C, jnp.dtype(x_blc.dtype).itemsize)
    tHo = int(tile_out_rows)
    assert Ho % tHo == 0, "tile_out_rows must divide H // 2"
    nT = Ho // tHo

    out = pl.pallas_call(
        _fused_conv_unshuffle_kernel,
        out_shape=jax.ShapeDtypeStruct((B, Ho, Wo, C4), x_blc.dtype),
        grid_spec=pltpu.PrefetchScalarGridSpec(
            num_scalar_prefetch=0,
            grid=(B, nT),
            in_specs=[
                # top halo row-pair (clamped at the image boundary; masked in-kernel)
                pl.BlockSpec((None, 1, 2, Wo, C2),
                             lambda b, t: (b, jnp.maximum(t * tHo - 1, 0), 0, 0, 0)),
                # the tile's own row pairs
                pl.BlockSpec((None, tHo, 2, Wo, C2),
                             lambda b, t: (b, t, 0, 0, 0)),
                # bottom halo row-pair (clamped; masked in-kernel)
                pl.BlockSpec((None, 1, 2, Wo, C2),
                             lambda b, t: (b, jnp.minimum((t + 1) * tHo, Ho - 1), 0, 0, 0)),
                # expanded weight, resident across the whole grid
                pl.BlockSpec((16 * C, C4), lambda b, t: (0, 0)),
            ],
            out_specs=pl.BlockSpec((None, tHo, Wo, C4), lambda b, t: (b, t, 0, 0)),
            scratch_shapes=[pltpu.VMEM((tHo + 2, 2, Wo + 2, C2), x_blc.dtype)],
        ),
        compiler_params=pltpu.CompilerParams(
            dimension_semantics=("parallel", "parallel")),
    )(x6, x6, x6, w16)

    # (B, Ho, Wo, 4*Cout) -> (B, L//4, 4*Cout): contiguous regrouping, no HBM pass.
    return out.reshape(B, Ho * Wo, C4)


if __name__ == "__main__":
    key = jax.random.PRNGKey(0)
    k_x, k_w = jax.random.split(key)

    B = 2
    n_feat = 4        # C
    H = W = 16
    L = H * W

    x = jax.random.normal(k_x, (B, L, n_feat), dtype=jnp.float32)
    # Conv2d(n_feat, n_feat//2, 3) weight, PyTorch OIHW layout, bias=False.
    w = jax.random.normal(k_w, (n_feat // 2, n_feat, 3, 3), dtype=jnp.float32) * 0.1

    # Force 2 row tiles so the halo path is exercised.
    out = downsample_shuffle(x, w, tile_out_rows=4)
    out = jax.block_until_ready(out)
    assert out.shape == (B, L // 4, 2 * n_feat), out.shape

    # Pure-JAX reference: NCHW conv + PixelUnshuffle(2) + flatten + transpose.
    x_nchw = jnp.transpose(x, (0, 2, 1)).reshape(B, n_feat, H, W)
    y_ref = jax.lax.conv_general_dilated(
        x_nchw, w, window_strides=(1, 1), padding="SAME",
        dimension_numbers=("NCHW", "OIHW", "NCHW"))
    Cmid = n_feat // 2
    y_ref = y_ref.reshape(B, Cmid, H // 2, 2, W // 2, 2)
    y_ref = jnp.transpose(y_ref, (0, 1, 3, 5, 2, 4)).reshape(
        B, Cmid * 4, (H // 2) * (W // 2))
    ref = jnp.transpose(y_ref, (0, 2, 1))
    assert jnp.allclose(out, ref, atol=1e-3, rtol=1e-3), float(
        jnp.max(jnp.abs(out - ref)))

    # Also exercise the auto tile-size path (single row tile at this size).
    out2 = jax.block_until_ready(downsample_shuffle(x, w))
    assert jnp.allclose(out2, ref, atol=1e-3, rtol=1e-3)

    print("KERNEL_OK")
</pallas_src>

<mosaic_0001>
module attributes {stable_mosaic.version = 11 : i64} {
  func.func @_fused_conv_unshuffle_kernel(%arg0: i32, %arg1: i32, %arg2: memref<1x1x2x8x8xf32, #tpu.memory_space<vmem>>, %arg3: memref<1x4x2x8x8xf32, #tpu.memory_space<vmem>>, %arg4: memref<1x1x2x8x8xf32, #tpu.memory_space<vmem>>, %arg5: memref<64x8xf32, #tpu.memory_space<vmem>>, %arg6: memref<1x4x8x8xf32, #tpu.memory_space<vmem>>, %arg7: memref<6x2x10x8xf32, #tpu.memory_space<vmem>>) attributes {dimension_semantics = [#tpu.dimension_semantics<parallel>, #tpu.dimension_semantics<parallel>], iteration_bounds = array<i64: 2, 2>, scalar_prefetch = 0 : i64, scratch_operands = 1 : i64, tpu.core_type = #tpu.core_type<tc>, window_params = [{transform_indices = @transform_0, window_bounds = array<i64: 1, 1, 2, 8, 8>}, {transform_indices = @transform_1, window_bounds = array<i64: 1, 4, 2, 8, 8>}, {transform_indices = @transform_2, window_bounds = array<i64: 1, 1, 2, 8, 8>}, {pipeline_mode = #tpu.pipeline_mode<synchronous>, transform_indices = @transform_3, window_bounds = array<i64: 64, 8>}, {transform_indices = @transform_4, window_bounds = array<i64: 1, 4, 8, 8>}]} {
    %cst = arith.constant 0.000000e+00 : f32
    %0 = vector.broadcast %cst : f32 to vector<6x2x10x8xf32>
    %c0 = arith.constant 0 : index
    %c0_0 = arith.constant 0 : index
    %c0_1 = arith.constant 0 : index
    %c0_2 = arith.constant 0 : index
    %1 = vector.load %arg7[%c0, %c0_0, %c0_1, %c0_2] : memref<6x2x10x8xf32, #tpu.memory_space<vmem>>, vector<6x2x10x8xf32>
    tpu.vector_store %arg7[%c0, %c0_0, %c0_1, %c0_2], %0 {strides = array<i32>} : memref<6x2x10x8xf32, #tpu.memory_space<vmem>>, vector<6x2x10x8xf32>,
    %c0_3 = arith.constant 0 : index
    %c0_4 = arith.constant 0 : index
    %c0_5 = arith.constant 0 : index
    %c0_6 = arith.constant 0 : index
    %c0_7 = arith.constant 0 : index
    %2 = vector.load %arg3[%c0_3, %c0_4, %c0_5, %c0_6, %c0_7] : memref<1x4x2x8x8xf32, #tpu.memory_space<vmem>>, vector<1x4x2x8x8xf32>
    %3 = vector.shape_cast %2 : vector<1x4x2x8x8xf32> to vector<4x2x8x8xf32>
    %c1 = arith.constant 1 : index
    %c0_8 = arith.constant 0 : index
    %c1_9 = arith.constant 1 : index
    %c0_10 = arith.constant 0 : index
    %4 = vector.load %arg7[%c1, %c0_8, %c1_9, %c0_10] : memref<6x2x10x8xf32, #tpu.memory_space<vmem>>, vector<4x2x8x8xf32>
    tpu.vector_store %arg7[%c1, %c0_8, %c1_9, %c0_10], %3 {strides = array<i32>} : memref<6x2x10x8xf32, #tpu.memory_space<vmem>>, vector<4x2x8x8xf32>,
    %c0_i32 = arith.constant 0 : i32
    %5 = arith.cmpi sgt, %arg1, %c0_i32 : i32
    %6 = arith.extui %5 : i1 to i32
    %c0_i32_11 = arith.constant 0 : i32
    %7 = arith.cmpi ne, %6, %c0_i32_11 : i32
    scf.if %7 {
      %c0_82 = arith.constant 0 : index
      %c0_83 = arith.constant 0 : index
      %c1_84 = arith.constant 1 : index
      %c0_85 = arith.constant 0 : index
      %c0_86 = arith.constant 0 : index
      %51 = vector.load %arg2[%c0_82, %c0_83, %c1_84, %c0_85, %c0_86] : memref<1x1x2x8x8xf32, #tpu.memory_space<vmem>>, vector<1x1x1x8x8xf32>
      %52 = vector.shape_cast %51 : vector<1x1x1x8x8xf32> to vector<8x8xf32>
      %c0_87 = arith.constant 0 : index
      %c1_88 = arith.constant 1 : index
      %c1_89 = arith.constant 1 : index
      %c0_90 = arith.constant 0 : index
      %53 = vector.load %arg7[%c0_87, %c1_88, %c1_89, %c0_90] : memref<6x2x10x8xf32, #tpu.memory_space<vmem>>, vector<1x1x8x8xf32>
      %54 = vector.shape_cast %53 : vector<1x1x8x8xf32> to vector<8x8xf32>
      %55 = vector.shape_cast %52 : vector<8x8xf32> to vector<1x1x8x8xf32>
      tpu.vector_store %arg7[%c0_87, %c1_88, %c1_89, %c0_90], %55 {strides = array<i32>} : memref<6x2x10x8xf32, #tpu.memory_space<vmem>>, vector<1x1x8x8xf32>,
    } else {
    }
    %c1_i32 = arith.constant 1 : i32
    %8 = arith.cmpi slt, %arg1, %c1_i32 : i32
    %9 = arith.extui %8 : i1 to i32
    %c0_i32_12 = arith.constant 0 : i32
    %10 = arith.cmpi ne, %9, %c0_i32_12 : i32
    scf.if %10 {
      %c0_82 = arith.constant 0 : index
      %c0_83 = arith.constant 0 : index
      %c0_84 = arith.constant 0 : index
      %c0_85 = arith.constant 0 : index
      %c0_86 = arith.constant 0 : index
      %51 = vector.load %arg4[%c0_82, %c0_83, %c0_84, %c0_85, %c0_86] : memref<1x1x2x8x8xf32, #tpu.memory_space<vmem>>, vector<1x1x1x8x8xf32>
      %52 = vector.shape_cast %51 : vector<1x1x1x8x8xf32> to vector<8x8xf32>
      %c5 = arith.constant 5 : index
      %c0_87 = arith.constant 0 : index
      %c1_88 = arith.constant 1 : index
      %c0_89 = arith.constant 0 : index
      %53 = vector.load %arg7[%c5, %c0_87, %c1_88, %c0_89] : memref<6x2x10x8xf32, #tpu.memory_space<vmem>>, vector<1x1x8x8xf32>
      %54 = vector.shape_cast %53 : vector<1x1x8x8xf32> to vector<8x8xf32>
      %55 = vector.shape_cast %52 : vector<8x8xf32> to vector<1x1x8x8xf32>
      tpu.vector_store %arg7[%c5, %c0_87, %c1_88, %c0_89], %55 {strides = array<i32>} : memref<6x2x10x8xf32, #tpu.memory_space<vmem>>, vector<1x1x8x8xf32>,
    } else {
    }
    %c0_13 = arith.constant 0 : index
    %c1_14 = arith.constant 1 : index
    %c0_15 = arith.constant 0 : index
    %c4 = arith.constant 4 : index
    %11 = vector.load %arg7[%c0_13, %c1_14, %c0_15, %c4] : memref<6x2x10x8xf32, #tpu.memory_space<vmem>>, vector<4x1x8x4xf32>
    %12 = vector.shape_cast %11 : vector<4x1x8x4xf32> to vector<4x8x4xf32>
    %c0_16 = arith.constant 0 : index
    %c1_17 = arith.constant 1 : index
    %c1_18 = arith.constant 1 : index
    %c0_19 = arith.constant 0 : index
    %13 = vector.load %arg7[%c0_16, %c1_17, %c1_18, %c0_19] : memref<6x2x10x8xf32, #tpu.memory_space<vmem>>, vector<4x1x8x4xf32>
    %14 = vector.shape_cast %13 : vector<4x1x8x4xf32> to vector<4x8x4xf32>
    %c0_20 = arith.constant 0 : index
    %c1_21 = arith.constant 1 : index
    %c1_22 = arith.constant 1 : index
    %c4_23 = arith.constant 4 : index
    %15 = vector.load %arg7[%c0_20, %c1_21, %c1_22, %c4_23] : memref<6x2x10x8xf32, #tpu.memory_space<vmem>>, vector<4x1x8x4xf32>
    %16 = vector.shape_cast %15 : vector<4x1x8x4xf32> to vector<4x8x4xf32>
    %c0_24 = arith.constant 0 : index
    %c1_25 = arith.constant 1 : index
    %c2 = arith.constant 2 : index
    %c0_26 = arith.constant 0 : index
    %17 = vector.load %arg7[%c0_24, %c1_25, %c2, %c0_26] : memref<6x2x10x8xf32, #tpu.memory_space<vmem>>, vector<4x1x8x4xf32>
    %18 = vector.shape_cast %17 : vector<4x1x8x4xf32> to vector<4x8x4xf32>
    %c1_27 = arith.constant 1 : index
    %c0_28 = arith.constant 0 : index
    %c0_29 = arith.constant 0 : index
    %c4_30 = arith.constant 4 : index
    %19 = vector.load %arg7[%c1_27, %c0_28, %c0_29, %c4_30] : memref<6x2x10x8xf32, #tpu.memory_space<vmem>>, vector<4x1x8x4xf32>
    %20 = vector.shape_cast %19 : vector<4x1x8x4xf32> to vector<4x8x4xf32>
    %c1_31 = arith.constant 1 : index
    %c0_32 = arith.constant 0 : index
    %c1_33 = arith.constant 1 : index
    %c0_34 = arith.constant 0 : index
    %21 = vector.load %arg7[%c1_31, %c0_32, %c1_33, %c0_34] : memref<6x2x10x8xf32, #tpu.memory_space<vmem>>, vector<4x1x8x4xf32>
    %22 = vector.shape_cast %21 : vector<4x1x8x4xf32> to vector<4x8x4xf32>
    %c1_35 = arith.constant 1 : index
    %c0_36 = arith.constant 0 : index
    %c1_37 = arith.constant 1 : index
    %c4_38 = arith.constant 4 : index
    %23 = vector.load %arg7[%c1_35, %c0_36, %c1_37, %c4_38] : memref<6x2x10x8xf32, #tpu.memory_space<vmem>>, vector<4x1x8x4xf32>
    %24 = vector.shape_cast %23 : vector<4x1x8x4xf32> to vector<4x8x4xf32>
    %c1_39 = arith.constant 1 : index
    %c0_40 = arith.constant 0 : index
    %c2_41 = arith.constant 2 : index
    %c0_42 = arith.constant 0 : index
    %25 = vector.load %arg7[%c1_39, %c0_40, %c2_41, %c0_42] : memref<6x2x10x8xf32, #tpu.memory_space<vmem>>, vector<4x1x8x4xf32>
    %26 = vector.shape_cast %25 : vector<4x1x8x4xf32> to vector<4x8x4xf32>
    %c1_43 = arith.constant 1 : index
    %c1_44 = arith.constant 1 : index
    %c0_45 = arith.constant 0 : index
    %c4_46 = arith.constant 4 : index
    %27 = vector.load %arg7[%c1_43, %c1_44, %c0_45, %c4_46] : memref<6x2x10x8xf32, #tpu.memory_space<vmem>>, vector<4x1x8x4xf32>
    %28 = vector.shape_cast %27 : vector<4x1x8x4xf32> to vector<4x8x4xf32>
    %c1_47 = arith.constant 1 : index
    %c1_48 = arith.constant 1 : index
    %c1_49 = arith.constant 1 : index
    %c0_50 = arith.constant 0 : index
    %29 = vector.load %arg7[%c1_47, %c1_48, %c1_49, %c0_50] : memref<6x2x10x8xf32, #tpu.memory_space<vmem>>, vector<4x1x8x4xf32>
    %30 = vector.shape_cast %29 : vector<4x1x8x4xf32> to vector<4x8x4xf32>
    %c1_51 = arith.constant 1 : index
    %c1_52 = arith.constant 1 : index
    %c1_53 = arith.constant 1 : index
    %c4_54 = arith.constant 4 : index
    %31 = vector.load %arg7[%c1_51, %c1_52, %c1_53, %c4_54] : memref<6x2x10x8xf32, #tpu.memory_space<vmem>>, vector<4x1x8x4xf32>
    %32 = vector.shape_cast %31 : vector<4x1x8x4xf32> to vector<4x8x4xf32>
    %c1_55 = arith.constant 1 : index
    %c1_56 = arith.constant 1 : index
    %c2_57 = arith.constant 2 : index
    %c0_58 = arith.constant 0 : index
    %33 = vector.load %arg7[%c1_55, %c1_56, %c2_57, %c0_58] : memref<6x2x10x8xf32, #tpu.memory_space<vmem>>, vector<4x1x8x4xf32>
    %34 = vector.shape_cast %33 : vector<4x1x8x4xf32> to vector<4x8x4xf32>
    %c2_59 = arith.constant 2 : index
    %c0_60 = arith.constant 0 : index
    %c0_61 = arith.constant 0 : index
    %c4_62 = arith.constant 4 : index
    %35 = vector.load %arg7[%c2_59, %c0_60, %c0_61, %c4_62] : memref<6x2x10x8xf32, #tpu.memory_space<vmem>>, vector<4x1x8x4xf32>
    %36 = vector.shape_cast %35 : vector<4x1x8x4xf32> to vector<4x8x4xf32>
    %c2_63 = arith.constant 2 : index
    %c0_64 = arith.constant 0 : index
    %c1_65 = arith.constant 1 : index
    %c0_66 = arith.constant 0 : index
    %37 = vector.load %arg7[%c2_63, %c0_64, %c1_65, %c0_66] : memref<6x2x10x8xf32, #tpu.memory_space<vmem>>, vector<4x1x8x4xf32>
    %38 = vector.shape_cast %37 : vector<4x1x8x4xf32> to vector<4x8x4xf32>
    %c2_67 = arith.constant 2 : index
    %c0_68 = arith.constant 0 : index
    %c1_69 = arith.constant 1 : index
    %c4_70 = arith.constant 4 : index
    %39 = vector.load %arg7[%c2_67, %c0_68, %c1_69, %c4_70] : memref<6x2x10x8xf32, #tpu.memory_space<vmem>>, vector<4x1x8x4xf32>
    %40 = vector.shape_cast %39 : vector<4x1x8x4xf32> to vector<4x8x4xf32>
    %c2_71 = arith.constant 2 : index
    %c0_72 = arith.constant 0 : index
    %c2_73 = arith.constant 2 : index
    %c0_74 = arith.constant 0 : index
    %41 = vector.load %arg7[%c2_71, %c0_72, %c2_73, %c0_74] : memref<6x2x10x8xf32, #tpu.memory_space<vmem>>, vector<4x1x8x4xf32>
    %42 = vector.shape_cast %41 : vector<4x1x8x4xf32> to vector<4x8x4xf32>
    %43 = tpu.concatenate %12, %14, %16, %18, %20, %22, %24, %26, %28, %30, %32, %34, %36, %38, %40, %42 in 2 : vector<4x8x4xf32>, vector<4x8x4xf32>, vector<4x8x4xf32>, vector<4x8x4xf32>, vector<4x8x4xf32>, vector<4x8x4xf32>, vector<4x8x4xf32>, vector<4x8x4xf32>, vector<4x8x4xf32>, vector<4x8x4xf32>, vector<4x8x4xf32>, vector<4x8x4xf32>, vector<4x8x4xf32>, vector<4x8x4xf32>, vector<4x8x4xf32>, vector<4x8x4xf32> -> vector<4x8x64xf32>
    %44 = vector.shape_cast %43 : vector<4x8x64xf32> to vector<32x64xf32>
    %c0_75 = arith.constant 0 : index
    %c0_76 = arith.constant 0 : index
    %45 = vector.load %arg5[%c0_75, %c0_76] : memref<64x8xf32, #tpu.memory_space<vmem>>, vector<64x8xf32>
    %cst_77 = arith.constant dense<0.000000e+00> : vector<32x8xf32>
    %46 = tpu.matmul %44, %45, %cst_77 {dimension_numbers = #tpu.dot_dimension_numbers<[1], [0], [0], [1], [0, 0, 1, 1], [], []>} : vector<32x64xf32>, vector<64x8xf32>, vector<32x8xf32> -> vector<32x8xf32>
    %47 = vector.shape_cast %46 : vector<32x8xf32> to vector<4x8x8xf32>
    %c0_78 = arith.constant 0 : index
    %c0_79 = arith.constant 0 : index
    %c0_80 = arith.constant 0 : index
    %c0_81 = arith.constant 0 : index
    %48 = vector.load %arg6[%c0_78, %c0_79, %c0_80, %c0_81] : memref<1x4x8x8xf32, #tpu.memory_space<vmem>>, vector<1x4x8x8xf32>
    %49 = vector.shape_cast %48 : vector<1x4x8x8xf32> to vector<4x8x8xf32>
    %50 = vector.shape_cast %47 : vector<4x8x8xf32> to vector<1x4x8x8xf32>
    tpu.vector_store %arg6[%c0_78, %c0_79, %c0_80, %c0_81], %50 {strides = array<i32>} : memref<1x4x8x8xf32, #tpu.memory_space<vmem>>, vector<1x4x8x8xf32>,
    return
  }
  func.func @transform_0(%arg0: i32, %arg1: i32) -> (i32, i32, i32, i32, i32) {
    %c4_i32 = arith.constant 4 : i32
    %0 = arith.muli %arg1, %c4_i32 : i32
    %c1_i32 = arith.constant 1 : i32
    %1 = arith.subi %0, %c1_i32 : i32
    %c0_i32 = arith.constant 0 : i32
    %2 = arith.maxsi %1, %c0_i32 : i32
    %c0_i32_0 = arith.constant 0 : i32
    %c0_i32_1 = arith.constant 0 : i32
    %c0_i32_2 = arith.constant 0 : i32
    %c0_i32_3 = arith.constant 0 : i32
    return %arg0, %2, %c0_i32_0, %c0_i32_1, %c0_i32_2 : i32, i32, i32, i32, i32
  }
  func.func @transform_1(%arg0: i32, %arg1: i32) -> (i32, i32, i32, i32, i32) {
    %c0_i32 = arith.constant 0 : i32
    %c0_i32_0 = arith.constant 0 : i32
    %c0_i32_1 = arith.constant 0 : i32
    %c0_i32_2 = arith.constant 0 : i32
    return %arg0, %arg1, %c0_i32, %c0_i32_0, %c0_i32_1 : i32, i32, i32, i32, i32
  }
  func.func @transform_2(%arg0: i32, %arg1: i32) -> (i32, i32, i32, i32, i32) {
    %c1_i32 = arith.constant 1 : i32
    %0 = arith.addi %arg1, %c1_i32 : i32
    %c4_i32 = arith.constant 4 : i32
    %1 = arith.muli %0, %c4_i32 : i32
    %c7_i32 = arith.constant 7 : i32
    %2 = arith.minsi %1, %c7_i32 : i32
    %c0_i32 = arith.constant 0 : i32
    %c0_i32_0 = arith.constant 0 : i32
    %c0_i32_1 = arith.constant 0 : i32
    %c0_i32_2 = arith.constant 0 : i32
    return %arg0, %2, %c0_i32, %c0_i32_0, %c0_i32_1 : i32, i32, i32, i32, i32
  }
  func.func @transform_3(%arg0: i32, %arg1: i32) -> (i32, i32) {
    %c0_i32 = arith.constant 0 : i32
    %c0_i32_0 = arith.constant 0 : i32
    %c0_i32_1 = arith.constant 0 : i32
    return %c0_i32, %c0_i32_0 : i32, i32
  }
  func.func @transform_4(%arg0: i32, %arg1: i32) -> (i32, i32, i32, i32) {
    %c0_i32 = arith.constant 0 : i32
    %c0_i32_0 = arith.constant 0 : i32
    %c0_i32_1 = arith.constant 0 : i32
    return %arg0, %arg1, %c0_i32, %c0_i32_0 : i32, i32, i32, i32
  }
}

</mosaic_0001>

<llo_original>
// kernel: tpu_custom_call.1
$region0: #{tpu_custom_call.1}
  #allocation0 [shape = 'u32[]', space=smem, size = 0x4, offset = 0x4, fixed_abs, tag = 'smem constant byte address 0x4 - core index']
  #allocation1 [shape = 'u32[144,128]{1,0:T(1,128)}', space=vmem, size = 0x12000, scoped, tag = 'internal scratch']
  #allocation2 [shape = 'f32[6,2,10,8]{3,2,1,0:T(8,128)}', space=vmem, size = 0x18000, scoped, tag = 'scratch operand']
  %s0 = inlined_call_operand.hbm [shape: f32[2,8,2,8,8], index: 0, kind: input, shape index: {}]
  %s1 = inlined_call_operand.hbm [shape: f32[2,8,2,8,8], index: 1, kind: input, shape index: {}]
  %s2 = inlined_call_operand.hbm [shape: f32[2,8,2,8,8], index: 2, kind: input, shape index: {}]
  %s3 = inlined_call_operand.vmem [shape: f32[64,8], index: 3, kind: input, shape index: {}]
  %s4 = inlined_call_operand.hbm [shape: f32[2,8,8,8], index: 4, kind: output, shape index: {}]
  %s5 = sld [smem:[#allocation0]]
  $region69: #{tpu_custom_call.1} parent=0
    _
  %s7 = ssub.s32 1, %s5
  %s8 = scalar_select 0, %s7, %s5
  $region1: #{tpu_custom_call.1} parent=0
    #allocation3 [shape = 'u8[16384]{0}', space=vmem, size = 0x4000, scoped, tag = 'input window, operand 0']
    #allocation4 [shape = 's32[2]{0}', space=sflag, size = 0x8, scoped, tag = 'scoped memory for tpu_custom_call.1']
    #allocation5 [shape = 's32[2]{0}', space=sflag, size = 0x8, scoped, tag = 'scoped memory for tpu_custom_call.1']
    #allocation6 [shape = 'u8[65536]{0}', space=vmem, size = 0x10000, scoped, tag = 'input window, operand 1']
    #allocation7 [shape = 's32[2]{0}', space=sflag, size = 0x8, scoped, tag = 'scoped memory for tpu_custom_call.1']
    #allocation8 [shape = 'u8[16384]{0}', space=vmem, size = 0x4000, scoped, tag = 'input window, operand 2']
    #allocation9 [shape = 'u8[32768]{0}', space=vmem, size = 0x8000, scoped, tag = 'output window, operand 0']
    %9 = vsyncpa [#allocation4], 0
    %s10 = scalar_lea.sflag [#allocation4], 1
    %11 = vsyncpa %s10, 0
    %12 = vsyncpa [#allocation7], 0
    %s13 = scalar_lea.sflag [#allocation7], 1
    %14 = vsyncpa %s13, 0
    %15 = vsyncpa [#allocation5], 0
    %s16 = scalar_lea.sflag [#allocation5], 1
    %17 = vsyncpa %s16, 0
    loop: start=0, step=1, limit=6
    $region2: #{tpu_custom_call.1} parent=1 // loop_pre_header
      _
    $region3: #{tpu_custom_call.1} parent=1 // loop_header
      %s19 = sphi 0, %s23
      %p20 = scmp.ge.s32.totalorder %s19, 6
      %s26 = sphi 0, %s38
      %s27 = sphi 0, %s34
      %s28 = sphi 0, %s26
      %s29 = sphi 0, %s27
      %s30 = sphi 0, %s28
      %s31 = sphi 0, %s29
      %s51 = sphi 0, %s53
      %s54 = sphi 0, %s51
      %s55 = sphi 0, %s54
      %s71 = sphi 0, %s55
      %s79 = sphi 0, %s81
      %s82 = sphi 0, %s79
      %s83 = sphi 0, %s82
      %s99 = sphi 0, %s83
      %s115 = sphi 0, %s117
      %s118 = sphi 0, %s115
      %s119 = sphi 0, %s118
      %s135 = sphi 0, %s119
      %s139 = sphi 0, %s139
      %s141 = sphi 0, %s139
      %s142 = sphi 0, %s141
      %s156 = sphi 0, %s142
      %s164 = sphi 0, %s166
      %s167 = sphi 0, %s164
      %s168 = sphi 0, %s167
      %s184 = sphi 0, %s168
    $region4: #{tpu_custom_call.1} parent=1 // loop_header_branch
      %22 = sbr.rel (%p20) target = $region8
    $region5: #{tpu_custom_call.1} parent=1 // loop_body
      %s24 = ssub.s32 %s19, 1
      %s25 = ssub.s32 %s19, 2
      %s32 = sadd.s32 1, %s27
      %p33 = scmp.ge.s32.totalorder %s32, 2
      %s34 = scalar_select %p33, 0, %s32
      %s35 = sadd.s32 1, %s26
      %s36 = scalar_select %p33, %s35, %s26
      %p37 = scmp.ge.s32.totalorder %s36, 2
      %s38 = scalar_select %p37, 0, %s36
      %s39 = smul.u32 %s27, 4
      %s40 = ssub.s32 %s39, 1
      %p41 = scmp.gt.s32.totalorder %s40, 0
      %s42 = scalar_select %p41, %s40, 0
      %s43 = smul.u32 %s34, 4
      %s44 = ssub.s32 %s43, 1
      %p45 = scmp.gt.s32.totalorder %s44, 0
      %s46 = scalar_select %p45, %s44, 0
      %s47 = ssub.s32 %s26, %s38
      %s48 = ssub.s32 %s42, %s46
      %s49 = sor.u32 %s47, %s48
      %p50 = scmp.eq.s32.totalorder %s49, 0
      %s52 = sadd.s32 %s51, 1
      %s53 = scalar_select %p50, %s51, %s52
      %p56 = pneg %p50
      %p57 = scmp.eq.s32.totalorder %s19, 3
      %p58 = por %p56, %p57
      %p59 = scmp.ne.s32.totalorder %s51, %s54
      %p60 = scmp.eq.s32.totalorder %s19, 0
      %p61 = por %p59, %p60
      %p62 = scmp.ne.s32.totalorder %s51, %s54
      %p63 = scmp.eq.s32.totalorder %s24, 3
      %p64 = por %p62, %p63
      %p65 = scmp.ne.s32.totalorder %s54, %s55
      %p66 = scmp.eq.s32.totalorder %s24, 0
      %p67 = por %p65, %p66
      %p68 = scmp.ne.s32.totalorder %s54, %s55
      %p69 = scmp.eq.s32.totalorder %s25, 3
      %p70 = por %p68, %p69
      %p72 = scmp.ne.s32.totalorder %s55, %s71
      %p73 = scmp.eq.s32.totalorder %s25, 0
      %p74 = por %p72, %p73
      %s75 = ssub.s32 %s26, %s38
      %s76 = ssub.s32 %s27, %s34
      %s77 = sor.u32 %s75, %s76
      %p78 = scmp.eq.s32.totalorder %s77, 0
      %s80 = sadd.s32 %s79, 1
      %s81 = scalar_select %p78, %s79, %s80
      %p84 = pneg %p78
      %p85 = scmp.eq.s32.totalorder %s19, 3
      %p86 = por %p84, %p85
      %p87 = scmp.ne.s32.totalorder %s79, %s82
      %p88 = scmp.eq.s32.totalorder %s19, 0
      %p89 = por %p87, %p88
      %p90 = scmp.ne.s32.totalorder %s79, %s82
      %p91 = scmp.eq.s32.totalorder %s24, 3
      %p92 = por %p90, %p91
      %p93 = scmp.ne.s32.totalorder %s82, %s83
      %p94 = scmp.eq.s32.totalorder %s24, 0
      %p95 = por %p93, %p94
      %p96 = scmp.ne.s32.totalorder %s82, %s83
      %p97 = scmp.eq.s32.totalorder %s25, 3
      %p98 = por %p96, %p97
      %p100 = scmp.ne.s32.totalorder %s83, %s99
      %p101 = scmp.eq.s32.totalorder %s25, 0
      %p102 = por %p100, %p101
      %s103 = sadd.s32 %s27, 1
      %s104 = smul.u32 %s103, 4
      %p105 = scmp.lt.s32.totalorder %s104, 7
      %s106 = scalar_select %p105, %s104, 7
      %s107 = sadd.s32 %s34, 1
      %s108 = smul.u32 %s107, 4
      %p109 = scmp.lt.s32.totalorder %s108, 7
      %s110 = scalar_select %p109, %s108, 7
      %s111 = ssub.s32 %s26, %s38
      %s112 = ssub.s32 %s106, %s110
      %s113 = sor.u32 %s111, %s112
      %p114 = scmp.eq.s32.totalorder %s113, 0
      %s116 = sadd.s32 %s115, 1
      %s117 = scalar_select %p114, %s115, %s116
      %p120 = pneg %p114
      %p121 = scmp.eq.s32.totalorder %s19, 3
      %p122 = por %p120, %p121
      %p123 = scmp.ne.s32.totalorder %s115, %s118
      %p124 = scmp.eq.s32.totalorder %s19, 0
      %p125 = por %p123, %p124
      %p126 = scmp.ne.s32.totalorder %s115, %s118
      %p127 = scmp.eq.s32.totalorder %s24, 3
      %p128 = por %p126, %p127
      %p129 = scmp.ne.s32.totalorder %s118, %s119
      %p130 = scmp.eq.s32.totalorder %s24, 0
      %p131 = por %p129, %p130
      %p132 = scmp.ne.s32.totalorder %s118, %s119
      %p133 = scmp.eq.s32.totalorder %s25, 3
      %p134 = por %p132, %p133
      %p136 = scmp.ne.s32.totalorder %s119, %s135
      %p137 = scmp.eq.s32.totalorder %s25, 0
      %p138 = por %p136, %p137
      %s140 = sadd.s32 %s139, 1
      %p143 = scmp.eq.s32.totalorder %s19, 3
      %p144 = scmp.ne.s32.totalorder %s139, %s141
      %p145 = scmp.eq.s32.totalorder %s19, 0
      %p146 = por %p144, %p145
      %p147 = scmp.ne.s32.totalorder %s139, %s141
      %p148 = scmp.eq.s32.totalorder %s24, 3
      %p149 = por %p147, %p148
      %p150 = scmp.ne.s32.totalorder %s141, %s142
      %p151 = scmp.eq.s32.totalorder %s24, 0
      %p152 = por %p150, %p151
      %p153 = scmp.ne.s32.totalorder %s141, %s142
      %p154 = scmp.eq.s32.totalorder %s25, 3
      %p155 = por %p153, %p154
      %p157 = scmp.ne.s32.totalorder %s142, %s156
      %p158 = scmp.eq.s32.totalorder %s25, 0
      %p159 = por %p157, %p158
      %s160 = ssub.s32 %s26, %s38
      %s161 = ssub.s32 %s27, %s34
      %s162 = sor.u32 %s160, %s161
      %p163 = scmp.eq.s32.totalorder %s162, 0
      %s165 = sadd.s32 %s164, 1
      %s166 = scalar_select %p163, %s164, %s165
      %p169 = pneg %p163
      %p170 = scmp.eq.s32.totalorder %s19, 3
      %p171 = por %p169, %p170
      %p172 = scmp.ne.s32.totalorder %s164, %s167
      %p173 = scmp.eq.s32.totalorder %s19, 0
      %p174 = por %p172, %p173
      %p175 = scmp.ne.s32.totalorder %s164, %s167
      %p176 = scmp.eq.s32.totalorder %s24, 3
      %p177 = por %p175, %p176
      %p178 = scmp.ne.s32.totalorder %s167, %s168
      %p179 = scmp.eq.s32.totalorder %s24, 0
      %p180 = por %p178, %p179
      %p181 = scmp.ne.s32.totalorder %s167, %s168
      %p182 = scmp.eq.s32.totalorder %s25, 3
      %p183 = por %p181, %p182
      %p185 = scmp.ne.s32.totalorder %s168, %s184
      %p186 = scmp.eq.s32.totalorder %s25, 0
      %p187 = por %p185, %p186
      %p188 = scmp.le.s32.totalorder 1, %s19
      %p189 = scmp.lt.s32.totalorder %s19, 5
      %p190 = pnand %p188, %p189
      %p191 = pneg %p190
      // Predicated region
      $region9: #{tpu_custom_call.1} parent=5 // pred_check
        _
      $region10: #{tpu_custom_call.1} parent=5 // pred_check_branch
        %193 = sbr.rel (%p190) target = $region12
      $region11: #{tpu_custom_call.1} parent=5 // pred_region
        %s194 = ssub.s32 %s19, 1
        // Predicated region
        $region13: #{tpu_custom_call.1} parent=11 // pred_check
          %p195 = pneg %p152
        $region14: #{tpu_custom_call.1} parent=11 // pred_check_branch
          %197 = sbr.rel (%p195) target = $region16
        $region15: #{tpu_custom_call.1} parent=11 // pred_region
          _
        $region16: #{tpu_custom_call.1} parent=11 // pred_fallthru
          _
      $region12: #{tpu_custom_call.1} parent=5 // pred_fallthru
        _
      %p198 = scmp.lt.s32.totalorder %s19, 4
      // Predicated region
      $region17: #{tpu_custom_call.1} parent=5 // pred_check
        %p199 = pneg %p198
      $region18: #{tpu_custom_call.1} parent=5 // pred_check_branch
        %201 = sbr.rel (%p199) target = $region20
      $region19: #{tpu_custom_call.1} parent=5 // pred_region
        // Predicated region
        $region21: #{tpu_custom_call.1} parent=19 // pred_check
          %p202 = pneg %p61
        $region22: #{tpu_custom_call.1} parent=19 // pred_check_branch
          %204 = sbr.rel (%p202) target = $region24
        $region23: #{tpu_custom_call.1} parent=19 // pred_region
          %s205 = sand.u32 %s51, 1
          %s206 = scalar_lea.sflag [#allocation4], %s205
          %s207 = sand.u32 %s51, 1
          %s208 = smul.addr %s207, 16
          %s209 = scalar_lea.vmem [#allocation3], %s208
          %s210 = smul.u32 %s27, 4
          %s211 = ssub.s32 %s210, 1
          %p212 = scmp.gt.s32.totalorder %s211, 0
          %s213 = scalar_select %p212, %s211, 0
          %s215 = ssub.s32 256, 256
          %216 = vsyncadd %s206, %s215
          %s217 = smul.addr %s213, 2
          %s218 = smul.addr %s26, 16
          %s219 = sadd.s32 %s217, %s218
          %s220 = smul.addr %s219, 128
          %s221 = scalar_lea.hbm %s0, %s220
          %s222 = sshll.u32 %s209, 4
          %s223 = int_to_ptr.vmem [resolvable:$true] %s222
          %228 = dma.hbm_to_vmem [thread:$0]  %s221, 256, %s223, %s206, 128, 128, 8
        $region24: #{tpu_custom_call.1} parent=19 // pred_fallthru
          _
        // Predicated region
        $region25: #{tpu_custom_call.1} parent=19 // pred_check
          %p229 = pneg %p89
        $region26: #{tpu_custom_call.1} parent=19 // pred_check_branch
          %231 = sbr.rel (%p229) target = $region28
        $region27: #{tpu_custom_call.1} parent=19 // pred_region
          %s232 = sand.u32 %s19, 1
          %s233 = scalar_lea.sflag [#allocation7], %s232
          %s234 = sand.u32 %s79, 1
          %s235 = smul.addr %s234, 64
          %s236 = scalar_lea.vmem [#allocation6], %s235
          %s237 = smul.u32 4, %s27
          %s239 = ssub.s32 1024, 1024
          %240 = vsyncadd %s233, %s239
          %s241 = smul.addr %s237, 2
          %s242 = smul.addr %s26, 16
          %s243 = sadd.s32 %s241, %s242
          %s244 = smul.addr %s243, 128
          %s245 = scalar_lea.hbm %s1, %s244
          %s246 = sshll.u32 %s236, 4
          %s247 = int_to_ptr.vmem [resolvable:$true] %s246
          %252 = dma.hbm_to_vmem [thread:$0]  %s245, 1024, %s247, %s233, 128, 128, 8
        $region28: #{tpu_custom_call.1} parent=19 // pred_fallthru
          _
        // Predicated region
        $region29: #{tpu_custom_call.1} parent=19 // pred_check
          %p253 = pneg %p125
        $region30: #{tpu_custom_call.1} parent=19 // pred_check_branch
          %255 = sbr.rel (%p253) target = $region32
        $region31: #{tpu_custom_call.1} parent=19 // pred_region
          %s256 = sand.u32 %s19, 1
          %s257 = scalar_lea.sflag [#allocation7], %s256
          %s258 = sand.u32 %s115, 1
          %s259 = smul.addr %s258, 16
          %s260 = scalar_lea.vmem [#allocation8], %s259
          %s261 = sadd.s32 %s27, 1
          %s262 = smul.u32 %s261, 4
          %p263 = scmp.lt.s32.totalorder %s262, 7
          %s264 = scalar_select %p263, %s262, 7
          %s266 = ssub.s32 256, 256
          %267 = vsyncadd %s257, %s266
          %s268 = smul.addr %s264, 2
          %s269 = smul.addr %s26, 16
          %s270 = sadd.s32 %s268, %s269
          %s271 = smul.addr %s270, 128
          %s272 = scalar_lea.hbm %s2, %s271
          %s273 = sshll.u32 %s260, 4
          %s274 = int_to_ptr.vmem [resolvable:$true] %s273
          %279 = dma.hbm_to_vmem [thread:$0]  %s272, 256, %s274, %s257, 128, 128, 8
        $region32: #{tpu_custom_call.1} parent=19 // pred_fallthru
          _
      $region20: #{tpu_custom_call.1} parent=5 // pred_fallthru
        _
      %p280 = scmp.le.s32.totalorder 1, %s19
      %p281 = scmp.lt.s32.totalorder %s19, 5
      %p282 = pnand %p280, %p281
      %p283 = pneg %p282
      // Predicated region
      $region33: #{tpu_custom_call.1} parent=5 // pred_check
        _
      $region34: #{tpu_custom_call.1} parent=5 // pred_check_branch
        %285 = sbr.rel (%p282) target = $region36
      $region35: #{tpu_custom_call.1} parent=5 // pred_region
        %s286 = ssub.s32 %s19, 1
        %s287 = sand.u32 %s54, 1
        %s288 = scalar_lea.sflag [#allocation4], %s287
        %s289 = sand.u32 %s54, 1
        %s290 = smul.addr %s289, 16
        %s291 = scalar_lea.vmem [#allocation3], %s290
        // Predicated region
        $region37: #{tpu_custom_call.1} parent=35 // pred_check
          %p292 = pneg %p67
        $region38: #{tpu_custom_call.1} parent=35 // pred_check_branch
          %294 = sbr.rel (%p292) target = $region40
        $region39: #{tpu_custom_call.1} parent=35 // pred_region
          %295 = dma.done %s288, 256
        $region40: #{tpu_custom_call.1} parent=35 // pred_fallthru
          _
        %s296 = sand.u32 %s24, 1
        %s297 = scalar_lea.sflag [#allocation7], %s296
        %s298 = sand.u32 %s82, 1
        %s299 = smul.addr %s298, 64
        %s300 = scalar_lea.vmem [#allocation6], %s299
        // Predicated region
        $region41: #{tpu_custom_call.1} parent=35 // pred_check
          %p301 = pneg %p95
        $region42: #{tpu_custom_call.1} parent=35 // pred_check_branch
          %303 = sbr.rel (%p301) target = $region44
        $region43: #{tpu_custom_call.1} parent=35 // pred_region
          %304 = dma.done %s297, 1024
        $region44: #{tpu_custom_call.1} parent=35 // pred_fallthru
          _
        %s305 = sand.u32 %s24, 1
        %s306 = scalar_lea.sflag [#allocation7], %s305
        %s307 = sand.u32 %s118, 1
        %s308 = smul.addr %s307, 16
        %s309 = scalar_lea.vmem [#allocation8], %s308
        // Predicated region
        $region45: #{tpu_custom_call.1} parent=35 // pred_check
          %p310 = pneg %p131
        $region46: #{tpu_custom_call.1} parent=35 // pred_check_branch
          %312 = sbr.rel (%p310) target = $region48
        $region47: #{tpu_custom_call.1} parent=35 // pred_region
          %313 = dma.done %s306, 256
        $region48: #{tpu_custom_call.1} parent=35 // pred_fallthru
          _
        %s314 = sand.u32 %s54, 1
        %s315 = scalar_lea.sflag [#allocation4], %s314
        %s316 = sand.u32 %s54, 1
        %s317 = smul.addr %s316, 16
        %s318 = scalar_lea.vmem [#allocation3], %s317
        %p319 = pneg %p67
        %p320 = pneg %p64
        %s321 = sand.u32 %s24, 1
        %s322 = scalar_lea.sflag [#allocation7], %s321
        %s323 = sand.u32 %s82, 1
        %s324 = smul.addr %s323, 64
        %s325 = scalar_lea.vmem [#allocation6], %s324
        %p326 = pneg %p95
        %p327 = pneg %p92
        %s328 = sand.u32 %s24, 1
        %s329 = scalar_lea.sflag [#allocation7], %s328
        %s330 = sand.u32 %s118, 1
        %s331 = smul.addr %s330, 16
        %s332 = scalar_lea.vmem [#allocation8], %s331
        %p333 = pneg %p131
        %p334 = pneg %p128
        %p335 = pneg %p152
        %p336 = pneg %p149
        %p337 = pneg %p180
        %p338 = pneg %p177
        %s339 = sand.u32 %s167, 1
        %s340 = scalar_lea.sflag [#allocation5], %s339
        %s341 = sand.u32 %s167, 1
        %s342 = smul.addr %s341, 32
        %s343 = scalar_lea.vmem [#allocation9], %s342
        %s344 = smul.u32 %s29, 4
        %s345 = ssub.s32 %s344, 1
        %p346 = scmp.gt.s32.totalorder %s345, 0
        %s347 = scalar_select %p346, %s345, 0
        %s348 = smul.u32 4, %s29
        %s349 = sadd.s32 %s29, 1
        %s350 = smul.u32 %s349, 4
        %p351 = scmp.lt.s32.totalorder %s350, 7
        %s352 = scalar_select %p351, %s350, 7
        %s353 = smul.u32 4, %s29
        %vm354 = vcmask 64512
        %355 = vst.msk [vmem:[#allocation2] sm:$0xff] %vm354, 0.0
        %vm356 = vcmask 58368
        %357 = vst.msk [vmem:[#allocation2 + $0x8] sm:$0x3] %vm356, 0.0
        %358 = vst.msk [vmem:[#allocation2 + $0x10] sm:$0xff] %vm354, 0.0
        %359 = vst.msk [vmem:[#allocation2 + $0x18] sm:$0x3] %vm356, 0.0
        %360 = vst.msk [vmem:[#allocation2 + $0x20] sm:$0xff] %vm354, 0.0
        %361 = vst.msk [vmem:[#allocation2 + $0x28] sm:$0x3] %vm356, 0.0
        %362 = vst.msk [vmem:[#allocation2 + $0x30] sm:$0xff] %vm354, 0.0
        %363 = vst.msk [vmem:[#allocation2 + $0x38] sm:$0x3] %vm356, 0.0
        %364 = vst.msk [vmem:[#allocation2 + $0x40] sm:$0xff] %vm354, 0.0
        %365 = vst.msk [vmem:[#allocation2 + $0x48] sm:$0x3] %vm356, 0.0
        %366 = vst.msk [vmem:[#allocation2 + $0x50] sm:$0xff] %vm354, 0.0
        %367 = vst.msk [vmem:[#allocation2 + $0x58] sm:$0x3] %vm356, 0.0
        %368 = vst.msk [vmem:[#allocation2 + $0x60] sm:$0xff] %vm354, 0.0
        %369 = vst.msk [vmem:[#allocation2 + $0x68] sm:$0x3] %vm356, 0.0
        %370 = vst.msk [vmem:[#allocation2 + $0x70] sm:$0xff] %vm354, 0.0
        %371 = vst.msk [vmem:[#allocation2 + $0x78] sm:$0x3] %vm356, 0.0
        %372 = vst.msk [vmem:[#allocation2 + $0x80] sm:$0xff] %vm354, 0.0
        %373 = vst.msk [vmem:[#allocation2 + $0x88] sm:$0x3] %vm356, 0.0
        %374 = vst.msk [vmem:[#allocation2 + $0x90] sm:$0xff] %vm354, 0.0
        %375 = vst.msk [vmem:[#allocation2 + $0x98] sm:$0x3] %vm356, 0.0
        %376 = vst.msk [vmem:[#allocation2 + $0xa0] sm:$0xff] %vm354, 0.0
        %377 = vst.msk [vmem:[#allocation2 + $0xa8] sm:$0x3] %vm356, 0.0
        %378 = vst.msk [vmem:[#allocation2 + $0xb0] sm:$0xff] %vm354, 0.0
        %379 = vst.msk [vmem:[#allocation2 + $0xb8] sm:$0x3] %vm356, 0.0
        %v380 = vld [vmem:[%s300] sm:$0xff]
        %v381 = vld [vmem:[%s300 + $0x8] sm:$0xff]
        %v382 = vld [vmem:[%s300 + $0x10] sm:$0xff]
        %v383 = vld [vmem:[%s300 + $0x18] sm:$0xff]
        %v384 = vld [vmem:[%s300 + $0x20] sm:$0xff]
        %v385 = vld [vmem:[%s300 + $0x28] sm:$0xff]
        %v386 = vld [vmem:[%s300 + $0x30] sm:$0xff]
        %v387 = vld [vmem:[%s300 + $0x38] sm:$0xff]
        %s388 = scalar_lea.vmem [#allocation2], 32
        %389 = vst.msk [vmem:[%s388 + $0x1] sm:$0xff] %vm354, %v380
        %390 = vst.msk [vmem:[%s388 + $0x11] sm:$0xff] %vm354, %v381
        %391 = vst.msk [vmem:[%s388 + $0x21] sm:$0xff] %vm354, %v382
        %392 = vst.msk [vmem:[%s388 + $0x31] sm:$0xff] %vm354, %v383
        %393 = vst.msk [vmem:[%s388 + $0x41] sm:$0xff] %vm354, %v384
        %394 = vst.msk [vmem:[%s388 + $0x51] sm:$0xff] %vm354, %v385
        %395 = vst.msk [vmem:[%s388 + $0x61] sm:$0xff] %vm354, %v386
        %396 = vst.msk [vmem:[%s388 + $0x71] sm:$0xff] %vm354, %v387
        %p397 = scmp.gt.s32.totalorder %s29, 0
        // Predicated region
        $region49: #{tpu_custom_call.1} parent=35 // pred_check
          %p398 = pneg %p397
        $region50: #{tpu_custom_call.1} parent=35 // pred_check_branch
          %400 = sbr.rel (%p398) target = $region52
        $region51: #{tpu_custom_call.1} parent=35 // pred_region
          %s401 = scalar_lea.vmem %s291, 8 [#allocation3]
          %v402 = vld [vmem:[%s401] sm:$0xff]
          %s403 = scalar_lea.vmem [#allocation2], 16
          %404 = vst.msk [vmem:[%s403 + $0x1] sm:$0xff] %vm354, %v402
        $region52: #{tpu_custom_call.1} parent=35 // pred_fallthru
          _
        %p405 = scmp.lt.s32.totalorder %s29, 1
        // Predicated region
        $region53: #{tpu_custom_call.1} parent=35 // pred_check
          %p406 = pneg %p405
        $region54: #{tpu_custom_call.1} parent=35 // pred_check_branch
          %408 = sbr.rel (%p406) target = $region56
        $region55: #{tpu_custom_call.1} parent=35 // pred_region
          %v409 = vld [vmem:[%s309] sm:$0xff]
          %s410 = scalar_lea.vmem [#allocation2], 160
          %411 = vst.msk [vmem:[%s410 + $0x1] sm:$0xff] %vm354, %v409
        $region56: #{tpu_custom_call.1} parent=35 // pred_fallthru
          _
        %s412 = scalar_lea.vmem [#allocation2], 16
        %v413 = vld [vmem:[%s412] sm:$0xff]
        %v414 = vld [vmem:[%s412 + $0x20] sm:$0xff]
        %v415 = vld [vmem:[%s412 + $0x40] sm:$0xff]
        %v416 = vld [vmem:[%s412 + $0x60] sm:$0xff]
        %v417 = vld [vmem:[%s412 + $0x1] sm:$0xff]
        %v418 = vld [vmem:[%s412 + $0x21] sm:$0xff]
        %v419 = vld [vmem:[%s412 + $0x41] sm:$0xff]
        %v420 = vld [vmem:[%s412 + $0x61] sm:$0xff]
        %v421 = vld [vmem:[%s412 + $0x2] sm:$0xff]
        %v422 = vld [vmem:[%s412 + $0x22] sm:$0xff]
        %v423 = vld [vmem:[%s412 + $0x42] sm:$0xff]
        %v424 = vld [vmem:[%s412 + $0x62] sm:$0xff]
        %v425 = vld [vmem:[%s388] sm:$0xff]
        %v426 = vld [vmem:[%s388 + $0x20] sm:$0xff]
        %v427 = vld [vmem:[%s388 + $0x40] sm:$0xff]
        %v428 = vld [vmem:[%s388 + $0x60] sm:$0xff]
        %v429 = vld [vmem:[%s388 + $0x1] sm:$0xff]
        %v430 = vld [vmem:[%s388 + $0x21] sm:$0xff]
        %v431 = vld [vmem:[%s388 + $0x41] sm:$0xff]
        %v432 = vld [vmem:[%s388 + $0x61] sm:$0xff]
        %v433 = vld [vmem:[%s388 + $0x2] sm:$0xff]
        %v434 = vld [vmem:[%s388 + $0x22] sm:$0xff]
        %v435 = vld [vmem:[%s388 + $0x42] sm:$0xff]
        %v436 = vld [vmem:[%s388 + $0x62] sm:$0xff]
        %s437 = scalar_lea.vmem [#allocation2], 48
        %v438 = vld [vmem:[%s437] sm:$0xff]
        %v439 = vld [vmem:[%s437 + $0x20] sm:$0xff]
        %v440 = vld [vmem:[%s437 + $0x40] sm:$0xff]
        %v441 = vld [vmem:[%s437 + $0x60] sm:$0xff]
        %v442 = vld [vmem:[%s437 + $0x1] sm:$0xff]
        %v443 = vld [vmem:[%s437 + $0x21] sm:$0xff]
        %v444 = vld [vmem:[%s437 + $0x41] sm:$0xff]
        %v445 = vld [vmem:[%s437 + $0x61] sm:$0xff]
        %v446 = vld [vmem:[%s437 + $0x2] sm:$0xff]
        %v447 = vld [vmem:[%s437 + $0x22] sm:$0xff]
        %v448 = vld [vmem:[%s437 + $0x42] sm:$0xff]
        %v449 = vld [vmem:[%s437 + $0x62] sm:$0xff]
        %s450 = scalar_lea.vmem [#allocation2], 64
        %v451 = vld [vmem:[%s450] sm:$0xff]
        %v452 = vld [vmem:[%s450 + $0x20] sm:$0xff]
        %v453 = vld [vmem:[%s450 + $0x40] sm:$0xff]
        %v454 = vld [vmem:[%s450 + $0x60] sm:$0xff]
        %v455 = vld [vmem:[%s450 + $0x1] sm:$0xff]
        %v456 = vld [vmem:[%s450 + $0x21] sm:$0xff]
        %v457 = vld [vmem:[%s450 + $0x41] sm:$0xff]
        %v458 = vld [vmem:[%s450 + $0x61] sm:$0xff]
        %v459 = vld [vmem:[%s450 + $0x2] sm:$0xff]
        %v460 = vld [vmem:[%s450 + $0x22] sm:$0xff]
        %v461 = vld [vmem:[%s450 + $0x42] sm:$0xff]
        %v462 = vld [vmem:[%s450 + $0x62] sm:$0xff]
        %467 = vrot.lane.b32.xlu0 %v413, 124
        %v468 = vpop.permute.xlu0 %467
        %469 = vrot.lane.b32.xlu0 %v414, 124
        %v470 = vpop.permute.xlu0 %469
        %471 = vrot.lane.b32.xlu0 %v415, 124
        %v472 = vpop.permute.xlu0 %471
        %473 = vrot.lane.b32.xlu0 %v416, 124
        %v474 = vpop.permute.xlu0 %473
        %483 = vrot.lane.b32.xlu0 %v417, 4
        %v484 = vpop.permute.xlu0 %483
        %485 = vrot.lane.b32.xlu0 %v418, 4
        %v486 = vpop.permute.xlu0 %485
        %487 = vrot.lane.b32.xlu0 %v419, 4
        %v488 = vpop.permute.xlu0 %487
        %489 = vrot.lane.b32.xlu0 %v420, 4
        %v490 = vpop.permute.xlu0 %489
        %499 = vrot.lane.b32.xlu0 %v421, 12
        %v500 = vpop.permute.xlu0 %499
        %501 = vrot.lane.b32.xlu0 %v422, 12
        %v502 = vpop.permute.xlu0 %501
        %503 = vrot.lane.b32.xlu0 %v423, 12
        %v504 = vpop.permute.xlu0 %503
        %505 = vrot.lane.b32.xlu0 %v424, 12
        %v506 = vpop.permute.xlu0 %505
        %515 = vrot.lane.b32.xlu0 %v425, 12
        %v516 = vpop.permute.xlu0 %515
        %517 = vrot.lane.b32.xlu0 %v426, 12
        %v518 = vpop.permute.xlu0 %517
        %519 = vrot.lane.b32.xlu0 %v427, 12
        %v520 = vpop.permute.xlu0 %519
        %521 = vrot.lane.b32.xlu0 %v428, 12
        %v522 = vpop.permute.xlu0 %521
        %531 = vrot.lane.b32.xlu0 %v429, 20
        %v532 = vpop.permute.xlu0 %531
        %533 = vrot.lane.b32.xlu0 %v430, 20
        %v534 = vpop.permute.xlu0 %533
        %535 = vrot.lane.b32.xlu0 %v431, 20
        %v536 = vpop.permute.xlu0 %535
        %537 = vrot.lane.b32.xlu0 %v432, 20
        %v538 = vpop.permute.xlu0 %537
        %547 = vrot.lane.b32.xlu0 %v433, 28
        %v548 = vpop.permute.xlu0 %547
        %549 = vrot.lane.b32.xlu0 %v434, 28
        %v550 = vpop.permute.xlu0 %549
        %551 = vrot.lane.b32.xlu0 %v435, 28
        %v552 = vpop.permute.xlu0 %551
        %553 = vrot.lane.b32.xlu0 %v436, 28
        %v554 = vpop.permute.xlu0 %553
        %563 = vrot.lane.b32.xlu0 %v438, 28
        %v564 = vpop.permute.xlu0 %563
        %565 = vrot.lane.b32.xlu0 %v439, 28
        %v566 = vpop.permute.xlu0 %565
        %567 = vrot.lane.b32.xlu0 %v440, 28
        %v568 = vpop.permute.xlu0 %567
        %569 = vrot.lane.b32.xlu0 %v441, 28
        %v570 = vpop.permute.xlu0 %569
        %579 = vrot.lane.b32.xlu0 %v442, 36
        %v580 = vpop.permute.xlu0 %579
        %581 = vrot.lane.b32.xlu0 %v443, 36
        %v582 = vpop.permute.xlu0 %581
        %583 = vrot.lane.b32.xlu0 %v444, 36
        %v584 = vpop.permute.xlu0 %583
        %585 = vrot.lane.b32.xlu0 %v445, 36
        %v586 = vpop.permute.xlu0 %585
        %595 = vrot.lane.b32.xlu0 %v446, 44
        %v596 = vpop.permute.xlu0 %595
        %597 = vrot.lane.b32.xlu0 %v447, 44
        %v598 = vpop.permute.xlu0 %597
        %599 = vrot.lane.b32.xlu0 %v448, 44
        %v600 = vpop.permute.xlu0 %599
        %601 = vrot.lane.b32.xlu0 %v449, 44
        %v602 = vpop.permute.xlu0 %601
        %611 = vrot.lane.b32.xlu0 %v451, 44
        %v612 = vpop.permute.xlu0 %611
        %613 = vrot.lane.b32.xlu0 %v452, 44
        %v614 = vpop.permute.xlu0 %613
        %615 = vrot.lane.b32.xlu0 %v453, 44
        %v616 = vpop.permute.xlu0 %615
        %617 = vrot.lane.b32.xlu0 %v454, 44
        %v618 = vpop.permute.xlu0 %617
        %627 = vrot.lane.b32.xlu0 %v455, 52
        %v628 = vpop.permute.xlu0 %627
        %629 = vrot.lane.b32.xlu0 %v456, 52
        %v630 = vpop.permute.xlu0 %629
        %631 = vrot.lane.b32.xlu0 %v457, 52
        %v632 = vpop.permute.xlu0 %631
        %633 = vrot.lane.b32.xlu0 %v458, 52
        %v634 = vpop.permute.xlu0 %633
        %643 = vrot.lane.b32.xlu0 %v459, 60
        %v644 = vpop.permute.xlu0 %643
        %645 = vrot.lane.b32.xlu0 %v460, 60
        %v646 = vpop.permute.xlu0 %645
        %647 = vrot.lane.b32.xlu0 %v461, 60
        %v648 = vpop.permute.xlu0 %647
        %649 = vrot.lane.b32.xlu0 %v462, 60
        %v650 = vpop.permute.xlu0 %649
        %vm655 = vcmask 31744
        %v656 = vsel %vm655, %v468, %v484
        %v657 = vsel %vm655, %v470, %v486
        %v658 = vsel %vm655, %v472, %v488
        %v659 = vsel %vm655, %v474, %v490
        %v660 = vsel %vm354, %v656, %v484
        %v661 = vsel %vm354, %v657, %v486
        %v662 = vsel %vm354, %v658, %v488
        %v663 = vsel %vm354, %v659, %v490
        %vm664 = vcmask 97280
        %v665 = vsel %vm664, %v660, %v500
        %v666 = vsel %vm664, %v661, %v502
        %v667 = vsel %vm664, %v662, %v504
        %v668 = vsel %vm664, %v663, %v506
        %vm669 = vcmask 130048
        %v670 = vsel %vm669, %v665, %v516
        %v671 = vsel %vm669, %v666, %v518
        %v672 = vsel %vm669, %v667, %v520
        %v673 = vsel %vm669, %v668, %v522
        %vm674 = vcmask 162816
        %v675 = vsel %vm674, %v670, %v532
        %v676 = vsel %vm674, %v671, %v534
        %v677 = vsel %vm674, %v672, %v536
        %v678 = vsel %vm674, %v673, %v538
        %vm679 = vcmask 195584
        %v680 = vsel %vm679, %v675, %v532
        %v681 = vsel %vm679, %v676, %v534
        %v682 = vsel %vm679, %v677, %v536
        %v683 = vsel %vm679, %v678, %v538
        %vm684 = vcmask 228352
        %v685 = vsel %vm684, %v680, %v548
        %v686 = vsel %vm684, %v681, %v550
        %v687 = vsel %vm684, %v682, %v552
        %v688 = vsel %vm684, %v683, %v554
        %vm689 = vcmask 261120
        %v690 = vsel %vm689, %v685, %v564
        %v691 = vsel %vm689, %v686, %v566
        %v692 = vsel %vm689, %v687, %v568
        %v693 = vsel %vm689, %v688, %v570
        %vm694 = vcmask 293888
        %v695 = vsel %vm694, %v690, %v580
        %v696 = vsel %vm694, %v691, %v582
        %v697 = vsel %vm694, %v692, %v584
        %v698 = vsel %vm694, %v693, %v586
        %vm699 = vcmask 326656
        %v700 = vsel %vm699, %v695, %v580
        %v701 = vsel %vm699, %v696, %v582
        %v702 = vsel %vm699, %v697, %v584
        %v703 = vsel %vm699, %v698, %v586
        %vm704 = vcmask 359424
        %v705 = vsel %vm704, %v700, %v596
        %v706 = vsel %vm704, %v701, %v598
        %v707 = vsel %vm704, %v702, %v600
        %v708 = vsel %vm704, %v703, %v602
        %vm709 = vcmask 392192
        %v710 = vsel %vm709, %v705, %v612
        %v711 = vsel %vm709, %v706, %v614
        %v712 = vsel %vm709, %v707, %v616
        %v713 = vsel %vm709, %v708, %v618
        %vm714 = vcmask 424960
        %v715 = vsel %vm714, %v710, %v628
        %v716 = vsel %vm714, %v711, %v630
        %v717 = vsel %vm714, %v712, %v632
        %v718 = vsel %vm714, %v713, %v634
        %vm719 = vcmask 457728
        %v720 = vsel %vm719, %v715, %v628
        %v721 = vsel %vm719, %v716, %v630
        %v722 = vsel %vm719, %v717, %v632
        %v723 = vsel %vm719, %v718, %v634
        %vm724 = vcmask 490496
        %v725 = vsel %vm724, %v720, %v644
        %v726 = vsel %vm724, %v721, %v646
        %v727 = vsel %vm724, %v722, %v648
        %v728 = vsel %vm724, %v723, %v650
        %v729 = vld [vmem:[%s3] sm:$0xff]
        %v730 = vld [vmem:[%s3 + $0x8] sm:$0xff]
        %v731 = vld [vmem:[%s3 + $0x10] sm:$0xff]
        %v732 = vld [vmem:[%s3 + $0x18] sm:$0xff]
        %v733 = vld [vmem:[%s3 + $0x20] sm:$0xff]
        %v734 = vld [vmem:[%s3 + $0x28] sm:$0xff]
        %v735 = vld [vmem:[%s3 + $0x30] sm:$0xff]
        %v736 = vld [vmem:[%s3 + $0x38] sm:$0xff]
        %vm737 = vcmask 523264
        %v739 = vsel %vm737, %v725, 0
        %v742 = vsel %vm737, %v726, 0
        %v745 = vsel %vm737, %v727, 0
        %v748 = vsel %vm737, %v728, 0
        %750 = vmatprep.subr.mxu0 0.0
        %751 = vmatpush1.msra.mxu0 0.0
        %752 = vmatprep.subr.mxu0 0.0
        %753 = vmatpush1.msra.mxu0 0.0
        %754 = vmatprep.subr.mxu0 0.0
        %755 = vmatpush1.msra.mxu0 0.0
        %756 = vmatprep.subr.mxu0 0.0
        %757 = vmatpush1.msra.mxu0 0.0
        %758 = vmatprep.subr.mxu0 0.0
        %759 = vmatpush1.msra.mxu0 0.0
        %760 = vmatprep.subr.mxu0 0.0
        %761 = vmatpush1.msra.mxu0 0.0
        %762 = vmatprep.subr.mxu0 0.0
        %763 = vmatpush1.msra.mxu0 0.0
        %764 = vmatprep.subr.mxu0 0.0
        %765 = vmatpush1.msra.mxu0 0.0
        %766 = vmatprep.subr.mxu0 0.0
        %767 = vmatpush1.msra.mxu0 %v736
        %768 = vmatprep.subr.mxu0 0.0
        %769 = vmatpush1.msra.mxu0 %v735
        %770 = vmatprep.subr.mxu0 0.0
        %771 = vmatpush1.msra.mxu0 %v734
        %772 = vmatprep.subr.mxu0 0.0
        %773 = vmatpush1.msra.mxu0 %v733
        %774 = vmatprep.subr.mxu0 0.0
        %775 = vmatpush1.msra.mxu0 %v732
        %776 = vmatprep.subr.mxu0 0.0
        %777 = vmatpush1.msra.mxu0 %v731
        %778 = vmatprep.subr.mxu0 0.0
        %779 = vmatpush1.msra.mxu0 %v730
        %780 = vmatprep.subr.mxu0 0.0
        %781 = vmatpush1.msra.mxu0 %v729
        %782 = vmatprep.subr.mxu0 0.0
        %783 = vmatpush2.msra.mxu0 0.0
        %784 = vmatprep.subr.mxu0 0.0
        %785 = vmatpush2.msra.mxu0 0.0
        %786 = vmatprep.subr.mxu0 0.0
        %787 = vmatpush2.msra.mxu0 0.0
        %788 = vmatprep.subr.mxu0 0.0
        %789 = vmatpush2.msra.mxu0 0.0
        %790 = vmatprep.subr.mxu0 0.0
        %791 = vmatpush2.msra.mxu0 0.0
        %792 = vmatprep.subr.mxu0 0.0
        %793 = vmatpush2.msra.mxu0 0.0
        %794 = vmatprep.subr.mxu0 0.0
        %795 = vmatpush2.msra.mxu0 0.0
        %796 = vmatprep.subr.mxu0 0.0
        %797 = vmatpush2.msra.mxu0 0.0
        %798 = vmatprep.subr.mxu0 0.0
        %799 = vmatpush2.msra.mxu0 0.0
        %800 = vmatprep.subr.mxu0 0.0
        %801 = vmatpush2.msra.mxu0 0.0
        %802 = vmatprep.subr.mxu0 0.0
        %803 = vmatpush2.msra.mxu0 0.0
        %804 = vmatprep.subr.mxu0 0.0
        %805 = vmatpush2.msra.mxu0 0.0
        %806 = vmatprep.subr.mxu0 0.0
        %807 = vmatpush2.msra.mxu0 0.0
        %808 = vmatprep.subr.mxu0 0.0
        %809 = vmatpush2.msra.mxu0 0.0
        %810 = vmatprep.subr.mxu0 0.0
        %811 = vmatpush2.msra.mxu0 0.0
        %812 = vmatprep.subr.mxu0 0.0
        %813 = vmatpush2.msra.mxu0 0.0
        %814 = vmatprep.mubr.f32.mxu0 0.0
        %815 = vmatmul.mubr.f32.gmra.mxu0 %v739
        %v816 = vpop.f32.mrf.mxu0
        %v817 = vadd.f32 0.0, %v816
        %v818 = vpop.f32.mrf.mxu0
        %819 = vmatprep.mubr.f32.mxu0 0.0
        %820 = vmatmul.mubr.f32.gmra.mxu0 %v742
        %v821 = vpop.f32.mrf.mxu0
        %v822 = vadd.f32 0.0, %v821
        %v823 = vpop.f32.mrf.mxu0
        %824 = vmatprep.mubr.f32.mxu0 0.0
        %825 = vmatmul.mubr.f32.gmra.mxu0 %v745
        %v826 = vpop.f32.mrf.mxu0
        %v827 = vadd.f32 0.0, %v826
        %v828 = vpop.f32.mrf.mxu0
        %829 = vmatprep.mubr.f32.mxu0 0.0
        %830 = vmatmul.mubr.f32.gmra.mxu0 %v748
        %v831 = vpop.f32.mrf.mxu0
        %v832 = vadd.f32 0.0, %v831
        %v833 = vpop.f32.mrf.mxu0
        %834 = vdwg.mxu0
        %835 = vst.msk [vmem:[%s343] sm:$0xff] %vm354, %v817
        %836 = vst.msk [vmem:[%s343 + $0x8] sm:$0xff] %vm354, %v822
        %837 = vst.msk [vmem:[%s343 + $0x10] sm:$0xff] %vm354, %v827
        %838 = vst.msk [vmem:[%s343 + $0x18] sm:$0xff] %vm354, %v832
        %s839 = sand.u32 %s167, 1
        %s840 = scalar_lea.sflag [#allocation5], %s839
        %s841 = sand.u32 %s167, 1
        %s842 = smul.addr %s841, 32
        %s843 = scalar_lea.vmem [#allocation9], %s842
        // Predicated region
        $region57: #{tpu_custom_call.1} parent=35 // pred_check
          %p844 = pneg %p177
        $region58: #{tpu_custom_call.1} parent=35 // pred_check_branch
          %846 = sbr.rel (%p844) target = $region60
        $region59: #{tpu_custom_call.1} parent=35 // pred_region
          %s847 = smul.u32 4, %s29
          %s849 = ssub.s32 512, 512
          %850 = vsyncadd %s840, %s849
          %s851 = smul.addr %s28, 8
          %s852 = sadd.s32 %s847, %s851
          %s853 = smul.addr %s852, 128
          %s854 = scalar_lea.hbm %s4, %s853
          %s855 = sshll.u32 %s843, 4
          %s856 = int_to_ptr.vmem [resolvable:$true] %s855
          %861 = dma.vmem_to_hbm [thread:$0]  %s856, 512, %s854, %s840, 128, 128, 8
        $region60: #{tpu_custom_call.1} parent=35 // pred_fallthru
          _
      $region36: #{tpu_custom_call.1} parent=5 // pred_fallthru
        _
      %p862 = scmp.le.s32.totalorder 2, %s19
      // Predicated region
      $region61: #{tpu_custom_call.1} parent=5 // pred_check
        %p863 = pneg %p862
      $region62: #{tpu_custom_call.1} parent=5 // pred_check_branch
        %865 = sbr.rel (%p863) target = $region64
      $region63: #{tpu_custom_call.1} parent=5 // pred_region
        %s866 = ssub.s32 %s19, 2
        // Predicated region
        $region65: #{tpu_custom_call.1} parent=63 // pred_check
          %p867 = pneg %p183
        $region66: #{tpu_custom_call.1} parent=63 // pred_check_branch
          %869 = sbr.rel (%p867) target = $region68
        $region67: #{tpu_custom_call.1} parent=63 // pred_region
          %s870 = sand.u32 %s168, 1
          %s871 = scalar_lea.sflag [#allocation5], %s870
          %s872 = sand.u32 %s168, 1
          %s873 = smul.addr %s872, 32
          %s874 = scalar_lea.vmem [#allocation9], %s873
          %875 = dma.done %s871, 512
        $region68: #{tpu_custom_call.1} parent=63 // pred_fallthru
          _
      $region64: #{tpu_custom_call.1} parent=5 // pred_fallthru
        _
    $region6: #{tpu_custom_call.1} parent=1 // loop_footer
      %s23 = sadd.s32 1, %s19
    $region7: #{tpu_custom_call.1} parent=1 // loop_footer_branch
      %18 = sbr.rel target = $region3
    $region8: #{tpu_custom_call.1} parent=1 // loop_exit
      _
    %876 = vsyncpa [#allocation4], 1
    %s877 = scalar_lea.sflag [#allocation4], 1
    %878 = vsyncpa %s877, 1
    %879 = vsyncpa [#allocation7], 1
    %s880 = scalar_lea.sflag [#allocation7], 1
    %881 = vsyncpa %s880, 1
    %882 = vsyncpa [#allocation5], 1
    %s883 = scalar_lea.sflag [#allocation5], 1
    %884 = vsyncpa %s883, 1

</llo_original>
